<compile_context>
chip_gen: v7x
topology: tpu7x:2x2x1
jax: 0.10.0
libtpu: 0.0.40
codegen_flags: <defaults>
</compile_context>

<pallas_src>
import functools
import math

import jax
import jax.numpy as jnp
from jax.experimental import pallas as pl
from jax.experimental.pallas import tpu as pltpu

NEG_INF = -1e20  # neginf() from the reference module


# ------------------------- hardware-aware sizing helpers -------------------------
@functools.lru_cache(maxsize=None)
def _vmem_limit_bytes():
    """Generation-aware value for CompilerParams(vmem_limit_bytes=...)."""
    cap = 128 * 1024 * 1024
    try:
        cap = int(getattr(pltpu.get_tpu_info(), "vmem_capacity_bytes", cap)) or cap
    except Exception:
        pass
    if cap <= 64 * 1024 * 1024:
        # v7x-class core: 64 MiB total VMEM -> leave pipeline/compiler headroom.
        return max(32 * 1024 * 1024, min(52 * 1024 * 1024, cap - 12 * 1024 * 1024))
    # v5e / v6e: 128 MiB physical; don't sit at the 32 MiB scoped default.
    return min(100 * 1024 * 1024, cap - 28 * 1024 * 1024)


@functools.lru_cache(maxsize=None)
def _prefers_256():
    """True for chips with a 2x256x256 MXU (v6e/v7x); v2-v5 use 128x128 tiles."""
    try:
        kind = jax.devices()[0].device_kind.lower()
    except Exception:
        return True
    return not any(v in kind for v in ("v2", "v3", "v4", "v5"))


def _round_up(x, m):
    return ((x + m - 1) // m) * m


def _tq_candidates(Lq):
    base = (512, 256, 128, 64, 32, 16, 8) if _prefers_256() \
        else (512, 384, 256, 128, 64, 32, 16, 8)
    full = _round_up(Lq, 8)
    if full < base[0]:
        return (full,) + tuple(c for c in base if c < full)
    return base


def _pick_tq_weights(Lq, Lk, D, Dv, in_bytes, out_bytes, budget, kv_bufs):
    """Query tile for the weights-returning kernel (full key axis is resident)."""
    fixed = kv_bufs * Lk * (D + Dv) * in_bytes + 2 * Lk * 4        # K, V (+ bias)
    for tq in _tq_candidates(Lq):
        per = tq * (2 * D * in_bytes            # q blocks (double buffered)
                    + 2 * Dv * out_bytes        # o blocks
                    + 2 * Lk * out_bytes        # w blocks
                    + 3 * Lk * 4)               # s / e / w f32 temporaries
        if fixed + per <= budget:
            return tq
    # TODO(synk): for huge Lk a two-pass (stats, then weights) kernel is needed;
    # fall back to the smallest query tile and let the compiler deal with it.
    return 8


def _pick_flash_tiles(Lq, Lk, D, Dv, in_bytes, budget):
    """(tq, tk) for the flash kernel.  Prefer the whole key axis resident (nk=1:
    no K/V re-streaming, no online rescales); otherwise 128-aligned key tiles
    sized against the generation's VMEM budget."""
    if Lk <= 128:
        k_cands = (Lk,)
    else:
        full_k = _round_up(Lk, 128)
        ladder = (2048, 1024, 512, 256, 128) if _prefers_256() \
            else (2048, 1024, 512, 384, 256, 128)
        k_cands = (full_k,) + tuple(c for c in ladder if c < full_k)
    for tq in _tq_candidates(Lq):
        for tk in k_cands:
            use = (2 * tq * D * in_bytes             # q blocks
                   + 2 * tk * (D + Dv) * in_bytes    # k, v blocks
                   + 2 * tk * 4                      # key-bias blocks
                   + 2 * tq * Dv * 4                 # o blocks
                   + tq * (8 + Dv * 4)               # m, l, acc scratch
                   + tq * D * in_bytes               # scaled/cast q scratch
                   + 2 * tq * tk * 4)                # s / p f32 temporaries
            if use <= budget:
                return tq, tk
    return 8, (Lk if Lk <= 128 else 128)


def _mm(a, b, dims, mm_dtype):
    """dot_general with inputs cast to mm_dtype, f32 accumulation on the MXU."""
    return jax.lax.dot_general(
        a.astype(mm_dtype), b.astype(mm_dtype),
        dimension_numbers=(dims, ((), ())),
        preferred_element_type=jnp.float32)


# --------------------- kernel 1: query-tiled, returns weights ---------------------
def _attn_weights_kernel(scale, mm_dtype, residual, has_bias, *refs):
    if has_bias:
        q_ref, k_ref, v_ref, b_ref, o_ref, w_ref = refs
    else:
        q_ref, k_ref, v_ref, o_ref, w_ref = refs

    # 1/sqrt(d_k) folded into q (f32 scale, then cast once to the MXU dtype).
    q = (q_ref[0].astype(jnp.float32) * scale).astype(mm_dtype)       # (TQ, D)
    s = _mm(q, k_ref[0], ((1,), (1,)), mm_dtype)                      # (TQ, Lk) f32
    if has_bias:
        s = s + b_ref[0]                                              # (1, Lk) bias

    # softmax over keys, f32 throughout (matches softmax(dtype=torch.float)).
    m = jnp.max(s, axis=-1, keepdims=True)
    e = jnp.exp(s - m)
    inv = 1.0 / jnp.sum(e, axis=-1, keepdims=True)   # exact: w is user-visible
    w = e * inv

    o = _mm(w, v_ref[0], ((1,), (0,)), mm_dtype)                      # (TQ, Dv) f32
    if residual:
        o = o + q_ref[0].astype(jnp.float32)         # fused lhs_emb.add(xs)

    w_ref[0] = w.astype(w_ref.dtype)
    o_ref[0] = o.astype(o_ref.dtype)


# --------------------- kernel 2: flash-style (no weights output) -------------------
def _attn_flash_kernel(scale, mm_dtype, residual, has_bias, *refs):
    if has_bias:
        q_ref, k_ref, v_ref, b_ref, o_ref = refs[:5]
        m_scr, l_scr, acc_scr, q_scr = refs[5:]
    else:
        q_ref, k_ref, v_ref, o_ref = refs[:4]
        m_scr, l_scr, acc_scr, q_scr = refs[4:]

    ki = pl.program_id(2)

    @pl.when(ki == 0)
    def _():
        m_scr[...] = jnp.full(m_scr.shape, -jnp.inf, dtype=m_scr.dtype)
        l_scr[...] = jnp.zeros(l_scr.shape, dtype=l_scr.dtype)
        acc_scr[...] = jnp.zeros(acc_scr.shape, dtype=acc_scr.dtype)
        # scale + cast of q hoisted out of the key loop (once per query tile).
        q_scr[...] = (q_ref[0].astype(jnp.float32) * scale).astype(q_scr.dtype)

    s = _mm(q_scr[...], k_ref[0], ((1,), (1,)), mm_dtype)             # (TQ, TK) f32
    if has_bias:
        s = s + b_ref[0]

    # TODO(synk): on v6e/v7x an EUP-bound case could use bf16 exp for p.
    m_prev = m_scr[...]
    m_new = jnp.maximum(m_prev, jnp.max(s, axis=-1, keepdims=True))
    alpha = jnp.exp(m_prev - m_new)
    p = jnp.exp(s - m_new)
    l_scr[...] = alpha * l_scr[...] + jnp.sum(p, axis=-1, keepdims=True)
    acc_scr[...] = alpha * acc_scr[...] + _mm(p, v_ref[0], ((1,), (0,)), mm_dtype)
    m_scr[...] = m_new

    @pl.when(ki == pl.num_programs(2) - 1)
    def _():
        o = acc_scr[...] * pl.reciprocal(l_scr[...], approx=True)
        if residual:
            o = o + q_ref[0].astype(jnp.float32)     # fused lhs_emb.add(xs)
        o_ref[0] = o.astype(o_ref.dtype)


# ------------------------------------ wrapper --------------------------------------
def basic_attention(xs, ys, mask_ys=None, values=None, *, attn='sqrt', dim=2,
                    residual=False, get_weights=True, apply_mask=False,
                    use_bf16=True):
    """Forward pass of ParlAI BasicAttention (dot-product variants)."""
    if attn == 'cosine' or dim != 2:
        # TODO(synk): cosine-similarity / dim=1 variant (nn.CosineSimilarity over
        # the sequence axis) has no MXU-friendly form; only the bmm ('basic' /
        # 'sqrt') path with softmax over keys (dim=2) is implemented.
        raise NotImplementedError("only attn in {'basic','sqrt'} with dim=2")

    if values is None:
        values = ys

    B, Lq, D = xs.shape
    _, Lk, Dk = ys.shape
    Dv = values.shape[-1]
    assert D == Dk, "query and key embedding dims must match for bmm"
    assert values.shape[1] == Lk, "value_len must equal key_len for bmm(l2, values)"

    out_dtype = xs.dtype                      # reference carries the input dtype
    mm_dtype = jnp.bfloat16 if use_bf16 else jnp.float32
    # Pass the MXU dtype straight through the pallas_call boundary (no f32 upcast
    # in the wrapper): halves HBM->VMEM DMA bytes and K/V residency.
    in_dtype = mm_dtype
    in_bytes = jnp.finfo(in_dtype).bits // 8
    out_bytes = jnp.finfo(out_dtype).bits // 8

    scale = 1.0 / math.sqrt(Dk) if attn == 'sqrt' else 1.0
    vmem_limit = _vmem_limit_bytes()
    budget = int(vmem_limit * 0.85)

    xs_in = xs.astype(in_dtype)
    ys_in = ys.astype(in_dtype)
    vs_in = values.astype(in_dtype)

    want_mask = apply_mask and (mask_ys is not None)

    if get_weights:
        # K/V/bias block index is constant across the query-tile grid axis, so
        # double buffering them only wastes VMEM; single-buffer when big enough
        # to matter (frees Lk*(D+Dv) bytes for a larger query tile).
        single_kv = Lk * (D + Dv) * in_bytes > (4 << 20)
        kv_bufs = 1 if single_kv else 2

        def _kv_spec(shape, index_map):
            if single_kv:
                return pl.BlockSpec(shape, index_map, pipeline_mode=pl.Buffered(1))
            return pl.BlockSpec(shape, index_map)

        tq = _pick_tq_weights(Lq, Lk, D, Dv, in_bytes, out_bytes, budget, kv_bufs)
        Lq_pad = _round_up(Lq, tq)
        if Lq_pad != Lq:
            xs_in = jnp.pad(xs_in, ((0, 0), (0, Lq_pad - Lq), (0, 0)))
        nq = Lq_pad // tq

        in_specs = [
            pl.BlockSpec((1, tq, D), lambda b, qi: (b, qi, 0)),      # queries
            _kv_spec((1, Lk, D), lambda b, qi: (b, 0, 0)),           # keys
            _kv_spec((1, Lk, Dv), lambda b, qi: (b, 0, 0)),          # values
        ]
        args = [xs_in, ys_in, vs_in]
        if want_mask:
            key_bias = jnp.where(mask_ys == 0, NEG_INF, 0.0)
            key_bias = key_bias.astype(jnp.float32)[:, None, :]      # (B, 1, Lk)
            in_specs.append(_kv_spec((1, 1, Lk), lambda b, qi: (b, 0, 0)))
            args.append(key_bias)

        # NOTE: w's last dim is Lk; when Lk < 128 the weight store is a masked
        # partial store -- unavoidable given the module's (Lq, Lk) contract.
        out, w = pl.pallas_call(
            functools.partial(_attn_weights_kernel, scale, mm_dtype, residual,
                              want_mask),
            out_shape=(jax.ShapeDtypeStruct((B, Lq_pad, Dv), out_dtype),
                       jax.ShapeDtypeStruct((B, Lq_pad, Lk), out_dtype)),
            grid=(B, nq),
            in_specs=in_specs,
            out_specs=[pl.BlockSpec((1, tq, Dv), lambda b, qi: (b, qi, 0)),
                       pl.BlockSpec((1, tq, Lk), lambda b, qi: (b, qi, 0))],
            compiler_params=pltpu.CompilerParams(
                dimension_semantics=("parallel", "parallel"),
                vmem_limit_bytes=vmem_limit),
        )(*args)
        if Lq_pad != Lq:
            out = out[:, :Lq]
            w = w[:, :Lq]
    else:
        tq, tk = _pick_flash_tiles(Lq, Lk, D, Dv, in_bytes, budget)
        Lq_pad = _round_up(Lq, tq)
        Lk_pad = _round_up(Lk, tk)
        pad_q = Lq_pad - Lq
        pad_k = Lk_pad - Lk
        if pad_q:
            xs_in = jnp.pad(xs_in, ((0, 0), (0, pad_q), (0, 0)))
        if pad_k:
            ys_in = jnp.pad(ys_in, ((0, 0), (0, pad_k), (0, 0)))
            vs_in = jnp.pad(vs_in, ((0, 0), (0, pad_k), (0, 0)))
        nq = Lq_pad // tq
        nk = Lk_pad // tk

        has_bias = want_mask or pad_k > 0
        in_specs = [
            pl.BlockSpec((1, tq, D), lambda b, qi, ki: (b, qi, 0)),
            pl.BlockSpec((1, tk, D), lambda b, qi, ki: (b, ki, 0)),
            pl.BlockSpec((1, tk, Dv), lambda b, qi, ki: (b, ki, 0)),
        ]
        args = [xs_in, ys_in, vs_in]
        if has_bias:
            keep = (mask_ys != 0) if want_mask else jnp.ones((B, Lk), dtype=bool)
            if pad_k:
                keep = jnp.pad(keep, ((0, 0), (0, pad_k)), constant_values=False)
            key_bias = jnp.where(keep, 0.0, NEG_INF).astype(jnp.float32)[:, None, :]
            in_specs.append(pl.BlockSpec((1, 1, tk), lambda b, qi, ki: (b, 0, ki)))
            args.append(key_bias)

        out = pl.pallas_call(
            functools.partial(_attn_flash_kernel, scale, mm_dtype, residual,
                              has_bias),
            out_shape=jax.ShapeDtypeStruct((B, Lq_pad, Dv), out_dtype),
            grid=(B, nq, nk),
            in_specs=in_specs,
            out_specs=pl.BlockSpec((1, tq, Dv), lambda b, qi, ki: (b, qi, 0)),
            scratch_shapes=[pltpu.VMEM((tq, 1), jnp.float32),    # running max m
                            pltpu.VMEM((tq, 1), jnp.float32),    # running denom l
                            pltpu.VMEM((tq, Dv), jnp.float32),   # output accumulator
                            pltpu.VMEM((tq, D), mm_dtype)],      # scaled/cast q
            compiler_params=pltpu.CompilerParams(
                dimension_semantics=("parallel", "parallel", "arbitrary"),
                vmem_limit_bytes=vmem_limit),
        )(*args)
        if pad_q:
            out = out[:, :Lq]
        w = None

    if out.shape[dim - 1] == 1:                      # lhs_emb.squeeze(self.dim - 1)
        out = jnp.squeeze(out, axis=dim - 1)

    if get_weights:
        return out, w
    return out


if __name__ == "__main__":
    B, LQ, LK, D = 2, 8, 16, 32
    key = jax.random.PRNGKey(0)
    kx, ky = jax.random.split(key)
    xs = jax.random.normal(kx, (B, LQ, D), jnp.float32)
    ys = jax.random.normal(ky, (B, LK, D), jnp.float32)
    mask_ys = jnp.ones((B, LK), jnp.int32).at[0, 12:].set(0)

    # Pure-JAX reference (matches the PyTorch module: attn='sqrt', dim=2; the
    # module's non-in-place masked_fill means the mask does not alter l1).
    l1 = jnp.einsum('bqd,bkd->bqk', xs, ys) / math.sqrt(D)
    l2 = jax.nn.softmax(l1, axis=2)
    ref_out = jnp.einsum('bqk,bkd->bqd', l2, ys)

    # 1) module default output style: get_weights=True (weights kernel).
    out, w = basic_attention(xs, ys, mask_ys=mask_ys, attn='sqrt',
                             get_weights=True)
    out, w = jax.block_until_ready((out, w))
    assert out.shape == (B, LQ, D) and w.shape == (B, LQ, LK)
    assert bool(jnp.all(jnp.isfinite(out))) and bool(jnp.all(jnp.isfinite(w)))
    assert bool(jnp.allclose(out, ref_out, atol=5e-2, rtol=5e-2))
    assert bool(jnp.allclose(w, l2, atol=5e-2, rtol=5e-2))

    # 2) get_weights=False + residual (fused in-kernel): flash kernel.
    out2 = basic_attention(xs, ys, attn='sqrt', get_weights=False, residual=True)
    out2 = jax.block_until_ready(out2)
    assert bool(jnp.allclose(out2, ref_out + xs, atol=5e-2, rtol=5e-2))

    # 3) apply_mask=True (opts into the intended masking) on the flash path.
    bias = jnp.where(mask_ys == 0, NEG_INF, 0.0)[:, None, :]
    l2m = jax.nn.softmax(l1 + bias, axis=2)
    ref_m = jnp.einsum('bqk,bkd->bqd', l2m, ys)
    out3 = basic_attention(xs, ys, mask_ys=mask_ys, attn='sqrt',
                           get_weights=False, apply_mask=True)
    out3 = jax.block_until_ready(out3)
    assert bool(jnp.allclose(out3, ref_m, atol=5e-2, rtol=5e-2))

    # 4) non-multiple Lq / Lk exercises the padding path (+ pad-key masking),
    #    with distinct values, on both kernels.
    B2, LQ2, LK2, D2 = 2, 12, 200, 64
    k1, k2, k3 = jax.random.split(jax.random.PRNGKey(1), 3)
    xs2 = jax.random.normal(k1, (B2, LQ2, D2), jnp.float32)
    ys2 = jax.random.normal(k2, (B2, LK2, D2), jnp.float32)
    vs2 = jax.random.normal(k3, (B2, LK2, D2), jnp.float32)
    l1b = jnp.einsum('bqd,bkd->bqk', xs2, ys2) / math.sqrt(D2)
    l2b = jax.nn.softmax(l1b, axis=2)
    refb = jnp.einsum('bqk,bkd->bqd', l2b, vs2)
    o4, w4 = basic_attention(xs2, ys2, values=vs2, attn='sqrt', get_weights=True)
    o5 = basic_attention(xs2, ys2, values=vs2, attn='sqrt', get_weights=False)
    o4, w4, o5 = jax.block_until_ready((o4, w4, o5))
    assert o4.shape == (B2, LQ2, D2) and w4.shape == (B2, LQ2, LK2)
    assert bool(jnp.allclose(o4, refb, atol=5e-2, rtol=5e-2))
    assert bool(jnp.allclose(w4, l2b, atol=5e-2, rtol=5e-2))
    assert bool(jnp.allclose(o5, refb, atol=5e-2, rtol=5e-2))

    print("KERNEL_OK")
</pallas_src>

<mosaic_0001>
module attributes {stable_mosaic.version = 11 : i64} {
  func.func @_attn_weights_kernel(%arg0: i32, %arg1: i32, %arg2: memref<1x8x32xbf16, #tpu.memory_space<vmem>>, %arg3: memref<1x16x32xbf16, #tpu.memory_space<vmem>>, %arg4: memref<1x16x32xbf16, #tpu.memory_space<vmem>>, %arg5: memref<1x8x32xf32, #tpu.memory_space<vmem>>, %arg6: memref<1x8x16xf32, #tpu.memory_space<vmem>>) attributes {dimension_semantics = [#tpu.dimension_semantics<parallel>, #tpu.dimension_semantics<parallel>], iteration_bounds = array<i64: 2, 1>, scalar_prefetch = 0 : i64, scratch_operands = 0 : i64, tpu.core_type = #tpu.core_type<tc>, window_params = [{transform_indices = @transform_0, window_bounds = array<i64: 1, 8, 32>}, {transform_indices = @transform_1, window_bounds = array<i64: 1, 16, 32>}, {transform_indices = @transform_2, window_bounds = array<i64: 1, 16, 32>}, {transform_indices = @transform_3, window_bounds = array<i64: 1, 8, 32>}, {transform_indices = @transform_4, window_bounds = array<i64: 1, 8, 16>}]} {
    %c0 = arith.constant 0 : index
    %c0_0 = arith.constant 0 : index
    %c0_1 = arith.constant 0 : index
    %0 = vector.load %arg2[%c0, %c0_0, %c0_1] : memref<1x8x32xbf16, #tpu.memory_space<vmem>>, vector<1x8x32xbf16>
    %1 = vector.shape_cast %0 : vector<1x8x32xbf16> to vector<8x32xbf16>
    %2 = arith.extf %1 : vector<8x32xbf16> to vector<8x32xf32>
    %cst = arith.constant 0.176776692 : f32
    %3 = vector.broadcast %cst : f32 to vector<8x32xf32>
    %4 = arith.mulf %2, %3 : vector<8x32xf32>
    %5 = arith.truncf %4 : vector<8x32xf32> to vector<8x32xbf16>
    %c0_2 = arith.constant 0 : index
    %c0_3 = arith.constant 0 : index
    %c0_4 = arith.constant 0 : index
    %6 = vector.load %arg3[%c0_2, %c0_3, %c0_4] : memref<1x16x32xbf16, #tpu.memory_space<vmem>>, vector<1x16x32xbf16>
    %7 = vector.shape_cast %6 : vector<1x16x32xbf16> to vector<16x32xbf16>
    %cst_5 = arith.constant dense<0.000000e+00> : vector<8x16xf32>
    %8 = tpu.matmul %5, %7, %cst_5 {dimension_numbers = #tpu.dot_dimension_numbers<[1], [1], [0], [0], [0, 0, 1, 0], [], []>} : vector<8x32xbf16>, vector<16x32xbf16>, vector<8x16xf32> -> vector<8x16xf32>
    %cst_6 = arith.constant dense<0xFF800000> : vector<8xf32>
    %9 = vector.multi_reduction <maximumf>, %8, %cst_6 [1] : vector<8x16xf32> to vector<8xf32>
    %10 = vector.shape_cast %9 : vector<8xf32> to vector<8x1xf32>
    %11 = vector.broadcast %10 : vector<8x1xf32> to vector<8x16xf32>
    %12 = arith.subf %8, %11 : vector<8x16xf32>
    %13 = math.exp %12 : vector<8x16xf32>
    %cst_7 = arith.constant dense<0.000000e+00> : vector<8xf32>
    %14 = vector.multi_reduction <add>, %13, %cst_7 [1] : vector<8x16xf32> to vector<8xf32>
    %15 = vector.shape_cast %14 : vector<8xf32> to vector<8x1xf32>
    %cst_8 = arith.constant 1.000000e+00 : f32
    %16 = vector.broadcast %cst_8 : f32 to vector<8x1xf32>
    %17 = arith.divf %16, %15 : vector<8x1xf32>
    %18 = vector.broadcast %17 : vector<8x1xf32> to vector<8x16xf32>
    %19 = arith.mulf %13, %18 : vector<8x16xf32>
    %c0_9 = arith.constant 0 : index
    %c0_10 = arith.constant 0 : index
    %c0_11 = arith.constant 0 : index
    %20 = vector.load %arg4[%c0_9, %c0_10, %c0_11] : memref<1x16x32xbf16, #tpu.memory_space<vmem>>, vector<1x16x32xbf16>
    %21 = vector.shape_cast %20 : vector<1x16x32xbf16> to vector<16x32xbf16>
    %22 = arith.truncf %19 : vector<8x16xf32> to vector<8x16xbf16>
    %cst_12 = arith.constant dense<0.000000e+00> : vector<8x32xf32>
    %23 = tpu.matmul %22, %21, %cst_12 {dimension_numbers = #tpu.dot_dimension_numbers<[1], [0], [0], [1], [0, 0, 1, 1], [], []>} : vector<8x16xbf16>, vector<16x32xbf16>, vector<8x32xf32> -> vector<8x32xf32>
    %c0_13 = arith.constant 0 : index
    %c0_14 = arith.constant 0 : index
    %c0_15 = arith.constant 0 : index
    %24 = vector.load %arg6[%c0_13, %c0_14, %c0_15] : memref<1x8x16xf32, #tpu.memory_space<vmem>>, vector<1x8x16xf32>
    %25 = vector.shape_cast %24 : vector<1x8x16xf32> to vector<8x16xf32>
    %26 = vector.shape_cast %19 : vector<8x16xf32> to vector<1x8x16xf32>
    tpu.vector_store %arg6[%c0_13, %c0_14, %c0_15], %26 {strides = array<i32>} : memref<1x8x16xf32, #tpu.memory_space<vmem>>, vector<1x8x16xf32>,
    %c0_16 = arith.constant 0 : index
    %c0_17 = arith.constant 0 : index
    %c0_18 = arith.constant 0 : index
    %27 = vector.load %arg5[%c0_16, %c0_17, %c0_18] : memref<1x8x32xf32, #tpu.memory_space<vmem>>, vector<1x8x32xf32>
    %28 = vector.shape_cast %27 : vector<1x8x32xf32> to vector<8x32xf32>
    %29 = vector.shape_cast %23 : vector<8x32xf32> to vector<1x8x32xf32>
    tpu.vector_store %arg5[%c0_16, %c0_17, %c0_18], %29 {strides = array<i32>} : memref<1x8x32xf32, #tpu.memory_space<vmem>>, vector<1x8x32xf32>,
    return
  }
  func.func @transform_0(%arg0: i32, %arg1: i32) -> (i32, i32, i32) {
    %c0_i32 = arith.constant 0 : i32
    %c0_i32_0 = arith.constant 0 : i32
    return %arg0, %arg1, %c0_i32 : i32, i32, i32
  }
  func.func @transform_1(%arg0: i32, %arg1: i32) -> (i32, i32, i32) {
    %c0_i32 = arith.constant 0 : i32
    %c0_i32_0 = arith.constant 0 : i32
    %c0_i32_1 = arith.constant 0 : i32
    return %arg0, %c0_i32, %c0_i32_0 : i32, i32, i32
  }
  func.func @transform_2(%arg0: i32, %arg1: i32) -> (i32, i32, i32) {
    %c0_i32 = arith.constant 0 : i32
    %c0_i32_0 = arith.constant 0 : i32
    %c0_i32_1 = arith.constant 0 : i32
    return %arg0, %c0_i32, %c0_i32_0 : i32, i32, i32
  }
  func.func @transform_3(%arg0: i32, %arg1: i32) -> (i32, i32, i32) {
    %c0_i32 = arith.constant 0 : i32
    %c0_i32_0 = arith.constant 0 : i32
    return %arg0, %arg1, %c0_i32 : i32, i32, i32
  }
  func.func @transform_4(%arg0: i32, %arg1: i32) -> (i32, i32, i32) {
    %c0_i32 = arith.constant 0 : i32
    %c0_i32_0 = arith.constant 0 : i32
    return %arg0, %arg1, %c0_i32 : i32, i32, i32
  }
}

</mosaic_0001>

<llo_original>
// kernel: tpu_custom_call.1
$region0: #{tpu_custom_call.1}
  #allocation0 [shape = 'u32[]', space=smem, size = 0x4, offset = 0x4, fixed_abs, tag = 'smem constant byte address 0x4 - core index']
  #allocation1 [shape = 'u32[144,128]{1,0:T(1,128)}', space=vmem, size = 0x12000, scoped, tag = 'internal scratch']
  %s0 = inlined_call_operand.hbm [shape: bf16[2,8,32], index: 0, kind: input, shape index: {}]
  %s1 = inlined_call_operand.hbm [shape: bf16[2,16,32], index: 1, kind: input, shape index: {}]
  %s2 = inlined_call_operand.hbm [shape: bf16[2,16,32], index: 2, kind: input, shape index: {}]
  %s3 = inlined_call_operand.hbm [shape: f32[2,8,32], index: 3, kind: output, shape index: {0}]
  %s4 = inlined_call_operand.hbm [shape: f32[2,8,16], index: 4, kind: output, shape index: {1}]
  %5 = xla_tuple %s3, %s4
  %s6 = sld [smem:[#allocation0]]
  $region65: #{tpu_custom_call.1} parent=0
    _
  %s8 = ssub.s32 1, %s6
  %s9 = scalar_select 0, %s8, %s6
  $region1: #{tpu_custom_call.1} parent=0
    #allocation2 [shape = 'u8[4096]{0}', space=vmem, size = 0x1000, scoped, tag = 'input window, operand 0']
    #allocation3 [shape = 's32[2]{0}', space=sflag, size = 0x8, scoped, tag = 'scoped memory for tpu_custom_call.1']
    #allocation4 [shape = 's32[2]{0}', space=sflag, size = 0x8, scoped, tag = 'scoped memory for tpu_custom_call.1']
    #allocation5 [shape = 'u8[8192]{0}', space=vmem, size = 0x2000, scoped, tag = 'input window, operand 1']
    #allocation6 [shape = 's32[2]{0}', space=sflag, size = 0x8, scoped, tag = 'scoped memory for tpu_custom_call.1']
    #allocation7 [shape = 'u8[8192]{0}', space=vmem, size = 0x2000, scoped, tag = 'input window, operand 2']
    #allocation8 [shape = 'u8[8192]{0}', space=vmem, size = 0x2000, scoped, tag = 'output window, operand 0']
    #allocation9 [shape = 'u8[8192]{0}', space=vmem, size = 0x2000, scoped, tag = 'output window, operand 1']
    #allocation10 [shape = 's32[2]{0}', space=sflag, size = 0x8, scoped, tag = 'scoped memory for tpu_custom_call.1']
    %10 = vsyncpa [#allocation3], 0
    %s11 = scalar_lea.sflag [#allocation3], 1
    %12 = vsyncpa %s11, 0
    %13 = vsyncpa [#allocation6], 0
    %s14 = scalar_lea.sflag [#allocation6], 1
    %15 = vsyncpa %s14, 0
    %16 = vsyncpa [#allocation4], 0
    %s17 = scalar_lea.sflag [#allocation4], 1
    %18 = vsyncpa %s17, 0
    %19 = vsyncpa [#allocation10], 0
    %s20 = scalar_lea.sflag [#allocation10], 1
    %21 = vsyncpa %s20, 0
    loop: start=0, step=1, limit=4
    $region2: #{tpu_custom_call.1} parent=1 // loop_pre_header
      _
    $region3: #{tpu_custom_call.1} parent=1 // loop_header
      %s23 = sphi 0, %s27
      %p24 = scmp.ge.s32.totalorder %s23, 4
      %s30 = sphi 0, %s42
      %s31 = sphi 0, %s38
      %s32 = sphi 0, %s30
      %s33 = sphi 0, %s31
      %s34 = sphi 0, %s32
      %s35 = sphi 0, %s33
      %s47 = sphi 0, %s49
      %s50 = sphi 0, %s47
      %s51 = sphi 0, %s50
      %s67 = sphi 0, %s51
      %s73 = sphi 0, %s75
      %s76 = sphi 0, %s73
      %s77 = sphi 0, %s76
      %s93 = sphi 0, %s77
      %s99 = sphi 0, %s101
      %s102 = sphi 0, %s99
      %s103 = sphi 0, %s102
      %s119 = sphi 0, %s103
      %s127 = sphi 0, %s129
      %s130 = sphi 0, %s127
      %s131 = sphi 0, %s130
      %s147 = sphi 0, %s131
      %s155 = sphi 0, %s157
      %s158 = sphi 0, %s155
      %s159 = sphi 0, %s158
      %s175 = sphi 0, %s159
    $region4: #{tpu_custom_call.1} parent=1 // loop_header_branch
      %26 = sbr.rel (%p24) target = $region8
    $region5: #{tpu_custom_call.1} parent=1 // loop_body
      %s28 = ssub.s32 %s23, 1
      %s29 = ssub.s32 %s23, 2
      %s36 = sadd.s32 1, %s31
      %p37 = scmp.ge.s32.totalorder %s36, 1
      %s38 = scalar_select %p37, 0, %s36
      %s39 = sadd.s32 1, %s30
      %s40 = scalar_select %p37, %s39, %s30
      %p41 = scmp.ge.s32.totalorder %s40, 2
      %s42 = scalar_select %p41, 0, %s40
      %s43 = ssub.s32 %s30, %s42
      %s44 = ssub.s32 %s31, %s38
      %s45 = sor.u32 %s43, %s44
      %p46 = scmp.eq.s32.totalorder %s45, 0
      %s48 = sadd.s32 %s47, 1
      %s49 = scalar_select %p46, %s47, %s48
      %p52 = pneg %p46
      %p53 = scmp.eq.s32.totalorder %s23, 1
      %p54 = por %p52, %p53
      %p55 = scmp.ne.s32.totalorder %s47, %s50
      %p56 = scmp.eq.s32.totalorder %s23, 0
      %p57 = por %p55, %p56
      %p58 = scmp.ne.s32.totalorder %s47, %s50
      %p59 = scmp.eq.s32.totalorder %s28, 1
      %p60 = por %p58, %p59
      %p61 = scmp.ne.s32.totalorder %s50, %s51
      %p62 = scmp.eq.s32.totalorder %s28, 0
      %p63 = por %p61, %p62
      %p64 = scmp.ne.s32.totalorder %s50, %s51
      %p65 = scmp.eq.s32.totalorder %s29, 1
      %p66 = por %p64, %p65
      %p68 = scmp.ne.s32.totalorder %s51, %s67
      %p69 = scmp.eq.s32.totalorder %s29, 0
      %p70 = por %p68, %p69
      %s71 = ssub.s32 %s30, %s42
      %p72 = scmp.eq.s32.totalorder %s71, 0
      %s74 = sadd.s32 %s73, 1
      %s75 = scalar_select %p72, %s73, %s74
      %p78 = pneg %p72
      %p79 = scmp.eq.s32.totalorder %s23, 1
      %p80 = por %p78, %p79
      %p81 = scmp.ne.s32.totalorder %s73, %s76
      %p82 = scmp.eq.s32.totalorder %s23, 0
      %p83 = por %p81, %p82
      %p84 = scmp.ne.s32.totalorder %s73, %s76
      %p85 = scmp.eq.s32.totalorder %s28, 1
      %p86 = por %p84, %p85
      %p87 = scmp.ne.s32.totalorder %s76, %s77
      %p88 = scmp.eq.s32.totalorder %s28, 0
      %p89 = por %p87, %p88
      %p90 = scmp.ne.s32.totalorder %s76, %s77
      %p91 = scmp.eq.s32.totalorder %s29, 1
      %p92 = por %p90, %p91
      %p94 = scmp.ne.s32.totalorder %s77, %s93
      %p95 = scmp.eq.s32.totalorder %s29, 0
      %p96 = por %p94, %p95
      %s97 = ssub.s32 %s30, %s42
      %p98 = scmp.eq.s32.totalorder %s97, 0
      %s100 = sadd.s32 %s99, 1
      %s101 = scalar_select %p98, %s99, %s100
      %p104 = pneg %p98
      %p105 = scmp.eq.s32.totalorder %s23, 1
      %p106 = por %p104, %p105
      %p107 = scmp.ne.s32.totalorder %s99, %s102
      %p108 = scmp.eq.s32.totalorder %s23, 0
      %p109 = por %p107, %p108
      %p110 = scmp.ne.s32.totalorder %s99, %s102
      %p111 = scmp.eq.s32.totalorder %s28, 1
      %p112 = por %p110, %p111
      %p113 = scmp.ne.s32.totalorder %s102, %s103
      %p114 = scmp.eq.s32.totalorder %s28, 0
      %p115 = por %p113, %p114
      %p116 = scmp.ne.s32.totalorder %s102, %s103
      %p117 = scmp.eq.s32.totalorder %s29, 1
      %p118 = por %p116, %p117
      %p120 = scmp.ne.s32.totalorder %s103, %s119
      %p121 = scmp.eq.s32.totalorder %s29, 0
      %p122 = por %p120, %p121
      %s123 = ssub.s32 %s30, %s42
      %s124 = ssub.s32 %s31, %s38
      %s125 = sor.u32 %s123, %s124
      %p126 = scmp.eq.s32.totalorder %s125, 0
      %s128 = sadd.s32 %s127, 1
      %s129 = scalar_select %p126, %s127, %s128
      %p132 = pneg %p126
      %p133 = scmp.eq.s32.totalorder %s23, 1
      %p134 = por %p132, %p133
      %p135 = scmp.ne.s32.totalorder %s127, %s130
      %p136 = scmp.eq.s32.totalorder %s23, 0
      %p137 = por %p135, %p136
      %p138 = scmp.ne.s32.totalorder %s127, %s130
      %p139 = scmp.eq.s32.totalorder %s28, 1
      %p140 = por %p138, %p139
      %p141 = scmp.ne.s32.totalorder %s130, %s131
      %p142 = scmp.eq.s32.totalorder %s28, 0
      %p143 = por %p141, %p142
      %p144 = scmp.ne.s32.totalorder %s130, %s131
      %p145 = scmp.eq.s32.totalorder %s29, 1
      %p146 = por %p144, %p145
      %p148 = scmp.ne.s32.totalorder %s131, %s147
      %p149 = scmp.eq.s32.totalorder %s29, 0
      %p150 = por %p148, %p149
      %s151 = ssub.s32 %s30, %s42
      %s152 = ssub.s32 %s31, %s38
      %s153 = sor.u32 %s151, %s152
      %p154 = scmp.eq.s32.totalorder %s153, 0
      %s156 = sadd.s32 %s155, 1
      %s157 = scalar_select %p154, %s155, %s156
      %p160 = pneg %p154
      %p161 = scmp.eq.s32.totalorder %s23, 1
      %p162 = por %p160, %p161
      %p163 = scmp.ne.s32.totalorder %s155, %s158
      %p164 = scmp.eq.s32.totalorder %s23, 0
      %p165 = por %p163, %p164
      %p166 = scmp.ne.s32.totalorder %s155, %s158
      %p167 = scmp.eq.s32.totalorder %s28, 1
      %p168 = por %p166, %p167
      %p169 = scmp.ne.s32.totalorder %s158, %s159
      %p170 = scmp.eq.s32.totalorder %s28, 0
      %p171 = por %p169, %p170
      %p172 = scmp.ne.s32.totalorder %s158, %s159
      %p173 = scmp.eq.s32.totalorder %s29, 1
      %p174 = por %p172, %p173
      %p176 = scmp.ne.s32.totalorder %s159, %s175
      %p177 = scmp.eq.s32.totalorder %s29, 0
      %p178 = por %p176, %p177
      %p179 = scmp.le.s32.totalorder 1, %s23
      %p180 = scmp.lt.s32.totalorder %s23, 3
      %p181 = pnand %p179, %p180
      %p182 = pneg %p181
      // Predicated region
      $region9: #{tpu_custom_call.1} parent=5 // pred_check
        _
      $region10: #{tpu_custom_call.1} parent=5 // pred_check_branch
        %184 = sbr.rel (%p181) target = $region12
      $region11: #{tpu_custom_call.1} parent=5 // pred_region
        %s185 = ssub.s32 %s23, 1
      $region12: #{tpu_custom_call.1} parent=5 // pred_fallthru
        _
      %p186 = scmp.lt.s32.totalorder %s23, 2
      // Predicated region
      $region13: #{tpu_custom_call.1} parent=5 // pred_check
        %p187 = pneg %p186
      $region14: #{tpu_custom_call.1} parent=5 // pred_check_branch
        %189 = sbr.rel (%p187) target = $region16
      $region15: #{tpu_custom_call.1} parent=5 // pred_region
        // Predicated region
        $region17: #{tpu_custom_call.1} parent=15 // pred_check
          %p190 = pneg %p57
        $region18: #{tpu_custom_call.1} parent=15 // pred_check_branch
          %192 = sbr.rel (%p190) target = $region20
        $region19: #{tpu_custom_call.1} parent=15 // pred_region
          %s193 = sand.u32 %s47, 1
          %s194 = scalar_lea.sflag [#allocation3], %s193
          %s195 = sand.u32 %s47, 1
          %s196 = smul.addr %s195, 4
          %s197 = scalar_lea.vmem [#allocation2], %s196
          %s199 = ssub.s32 64, 64
          %200 = vsyncadd %s194, %s199
          %s201 = sadd.s32 %s31, %s30
          %s202 = smul.addr %s201, 64
          %s203 = scalar_lea.hbm %s0, %s202
          %s205 = sshll.u32 %s197, 4
          %s206 = int_to_ptr.vmem [resolvable:$true] %s205
          %208 = dma.hbm_to_vmem [thread:$0]  %s203, 64, %s206, %s194
        $region20: #{tpu_custom_call.1} parent=15 // pred_fallthru
          _
        // Predicated region
        $region21: #{tpu_custom_call.1} parent=15 // pred_check
          %p209 = pneg %p83
        $region22: #{tpu_custom_call.1} parent=15 // pred_check_branch
          %211 = sbr.rel (%p209) target = $region24
        $region23: #{tpu_custom_call.1} parent=15 // pred_region
          %s212 = sand.u32 %s23, 1
          %s213 = scalar_lea.sflag [#allocation6], %s212
          %s214 = sand.u32 %s73, 1
          %s215 = smul.addr %s214, 8
          %s216 = scalar_lea.vmem [#allocation5], %s215
          %s218 = ssub.s32 128, 128
          %219 = vsyncadd %s213, %s218
          %s220 = smul.addr %s30, 2
          %s221 = smul.addr %s220, 64
          %s222 = scalar_lea.hbm %s1, %s221
          %s223 = sshll.u32 %s216, 4
          %s224 = int_to_ptr.vmem [resolvable:$true] %s223
          %229 = dma.hbm_to_vmem [thread:$0]  %s222, 128, %s224, %s213, 64, 64, 4
        $region24: #{tpu_custom_call.1} parent=15 // pred_fallthru
          _
        // Predicated region
        $region25: #{tpu_custom_call.1} parent=15 // pred_check
          %p230 = pneg %p109
        $region26: #{tpu_custom_call.1} parent=15 // pred_check_branch
          %232 = sbr.rel (%p230) target = $region28
        $region27: #{tpu_custom_call.1} parent=15 // pred_region
          %s233 = sand.u32 %s23, 1
          %s234 = scalar_lea.sflag [#allocation6], %s233
          %s235 = sand.u32 %s99, 1
          %s236 = smul.addr %s235, 8
          %s237 = scalar_lea.vmem [#allocation7], %s236
          %s239 = ssub.s32 128, 128
          %240 = vsyncadd %s234, %s239
          %s241 = smul.addr %s30, 2
          %s242 = smul.addr %s241, 64
          %s243 = scalar_lea.hbm %s2, %s242
          %s244 = sshll.u32 %s237, 4
          %s245 = int_to_ptr.vmem [resolvable:$true] %s244
          %250 = dma.hbm_to_vmem [thread:$0]  %s243, 128, %s245, %s234, 64, 64, 4
        $region28: #{tpu_custom_call.1} parent=15 // pred_fallthru
          _
      $region16: #{tpu_custom_call.1} parent=5 // pred_fallthru
        _
      %p251 = scmp.le.s32.totalorder 1, %s23
      %p252 = scmp.lt.s32.totalorder %s23, 3
      %p253 = pnand %p251, %p252
      %p254 = pneg %p253
      // Predicated region
      $region29: #{tpu_custom_call.1} parent=5 // pred_check
        _
      $region30: #{tpu_custom_call.1} parent=5 // pred_check_branch
        %256 = sbr.rel (%p253) target = $region32
      $region31: #{tpu_custom_call.1} parent=5 // pred_region
        %s257 = ssub.s32 %s23, 1
        %s258 = sand.u32 %s50, 1
        %s259 = scalar_lea.sflag [#allocation3], %s258
        %s260 = sand.u32 %s50, 1
        %s261 = smul.addr %s260, 4
        %s262 = scalar_lea.vmem [#allocation2], %s261
        // Predicated region
        $region33: #{tpu_custom_call.1} parent=31 // pred_check
          %p263 = pneg %p63
        $region34: #{tpu_custom_call.1} parent=31 // pred_check_branch
          %265 = sbr.rel (%p263) target = $region36
        $region35: #{tpu_custom_call.1} parent=31 // pred_region
          %266 = dma.done %s259, 64
        $region36: #{tpu_custom_call.1} parent=31 // pred_fallthru
          _
        %s267 = sand.u32 %s28, 1
        %s268 = scalar_lea.sflag [#allocation6], %s267
        %s269 = sand.u32 %s76, 1
        %s270 = smul.addr %s269, 8
        %s271 = scalar_lea.vmem [#allocation5], %s270
        // Predicated region
        $region37: #{tpu_custom_call.1} parent=31 // pred_check
          %p272 = pneg %p89
        $region38: #{tpu_custom_call.1} parent=31 // pred_check_branch
          %274 = sbr.rel (%p272) target = $region40
        $region39: #{tpu_custom_call.1} parent=31 // pred_region
          %275 = dma.done %s268, 128
        $region40: #{tpu_custom_call.1} parent=31 // pred_fallthru
          _
        %s276 = sand.u32 %s28, 1
        %s277 = scalar_lea.sflag [#allocation6], %s276
        %s278 = sand.u32 %s102, 1
        %s279 = smul.addr %s278, 8
        %s280 = scalar_lea.vmem [#allocation7], %s279
        // Predicated region
        $region41: #{tpu_custom_call.1} parent=31 // pred_check
          %p281 = pneg %p115
        $region42: #{tpu_custom_call.1} parent=31 // pred_check_branch
          %283 = sbr.rel (%p281) target = $region44
        $region43: #{tpu_custom_call.1} parent=31 // pred_region
          %284 = dma.done %s277, 128
        $region44: #{tpu_custom_call.1} parent=31 // pred_fallthru
          _
        %s285 = sand.u32 %s50, 1
        %s286 = scalar_lea.sflag [#allocation3], %s285
        %s287 = sand.u32 %s50, 1
        %s288 = smul.addr %s287, 4
        %s289 = scalar_lea.vmem [#allocation2], %s288
        %p290 = pneg %p63
        %p291 = pneg %p60
        %s292 = sand.u32 %s28, 1
        %s293 = scalar_lea.sflag [#allocation6], %s292
        %s294 = sand.u32 %s76, 1
        %s295 = smul.addr %s294, 8
        %s296 = scalar_lea.vmem [#allocation5], %s295
        %p297 = pneg %p89
        %p298 = pneg %p86
        %s299 = sand.u32 %s28, 1
        %s300 = scalar_lea.sflag [#allocation6], %s299
        %s301 = sand.u32 %s102, 1
        %s302 = smul.addr %s301, 8
        %s303 = scalar_lea.vmem [#allocation7], %s302
        %p304 = pneg %p115
        %p305 = pneg %p112
        %p306 = pneg %p143
        %p307 = pneg %p140
        %s308 = sand.u32 %s130, 1
        %s309 = scalar_lea.sflag [#allocation4], %s308
        %s310 = sand.u32 %s130, 1
        %s311 = smul.addr %s310, 8
        %s312 = scalar_lea.vmem [#allocation8], %s311
        %p313 = pneg %p171
        %p314 = pneg %p168
        %s315 = sand.u32 %s158, 1
        %s316 = scalar_lea.sflag [#allocation10], %s315
        %s317 = sand.u32 %s158, 1
        %s318 = smul.addr %s317, 8
        %s319 = scalar_lea.vmem [#allocation9], %s318
        %v321 = vld [vmem:[%s262] sm:$0xf]
        %v322 = vunpack.c.l.bf16 %v321
        %v323 = vmul.f32 %v322, 0.17677669
        %v324 = vpack.c.bf16 %v323, %v323
        %v325 = vld [vmem:[%s271] sm:$0xf]
        %v326 = vld [vmem:[%s271 + $0x4] sm:$0xf]
        %v329 = vunpack.c.l.b16 %v325
        %v330 = vunpack.c.l.b16 %v326
        %v331 = vpack.c.b16 %v330, %v329
        %vm332 = vcmask 261120
        %v334 = vsel %vm332, %v324, 0
        %v337 = vsel %vm332, %v331, 0
        %339 = vmatprep.subr.bf16.mxu0 0
        %340 = vmatpush1.bf16.xpose.msra.mxu0 %v337
        %341 = vmatprep.subr.bf16.mxu0 0
        %342 = vmatpush1.bf16.xpose.msra.mxu0 0
        %343 = vmatprep.subr.bf16.mxu0 0
        %344 = vmatpush1.bf16.xpose.msra.mxu0 0
        %345 = vmatprep.subr.bf16.mxu0 0
        %346 = vmatpush1.bf16.xpose.msra.mxu0 0
        %347 = vmatprep.subr.bf16.mxu0 0
        %348 = vmatpush1.bf16.xpose.msra.mxu0 0
        %349 = vmatprep.subr.bf16.mxu0 0
        %350 = vmatpush1.bf16.xpose.msra.mxu0 0
        %351 = vmatprep.subr.bf16.mxu0 0
        %352 = vmatpush1.bf16.xpose.msra.mxu0 0
        %353 = vmatprep.subr.bf16.mxu0 0
        %354 = vmatpush1.bf16.xpose.msra.mxu0 0
        %355 = vmatprep.subr.bf16.mxu0 0
        %356 = vmatpush1.bf16.xpose.msra.mxu0 0
        %357 = vmatprep.subr.bf16.mxu0 0
        %358 = vmatpush1.bf16.xpose.msra.mxu0 0
        %359 = vmatprep.subr.bf16.mxu0 0
        %360 = vmatpush1.bf16.xpose.msra.mxu0 0
        %361 = vmatprep.subr.bf16.mxu0 0
        %362 = vmatpush1.bf16.xpose.msra.mxu0 0
        %363 = vmatprep.subr.bf16.mxu0 0
        %364 = vmatpush1.bf16.xpose.msra.mxu0 0
        %365 = vmatprep.subr.bf16.mxu0 0
        %366 = vmatpush1.bf16.xpose.msra.mxu0 0
        %367 = vmatprep.subr.bf16.mxu0 0
        %368 = vmatpush1.bf16.xpose.msra.mxu0 0
        %369 = vmatprep.subr.bf16.mxu0 0
        %370 = vmatpush1.bf16.xpose.msra.mxu0 0
        %371 = vmatprep.mubr.bf16.mxu0 0
        %372 = vmatmul.mubr.bf16.gmra.mrb[0].mxu0 %v334
        %v373 = vpop.f32.mrb[0].mxu0
        %v374 = vadd.f32 0.0, %v373
        %v375 = vpop.f32.mrb[0].mxu0
        %v376 = vpop.f32.mrb[0].mxu0
        %v377 = vpop.f32.mrb[0].mxu0
        %378 = vdwg.mxu0
        %vm379 = vcmask 130048
        %v380 = vsel %vm379, %v374, -inf
        %381 = vmax.xlane.f32.xlu0 %v380
        %v382 = vpop.xlane.xlu0 %381
        %v383 = vsub.f32 %v374, %v382
        %v384 = vmul.f32 %v383, 1.442695
        %v385 = vpow.pop %v384
        %v386 = vsel %vm379, %v385, 0.0
        %387 = vadd.xlane.f32.xlu0 %v386
        %v388 = vpop.xlane.xlu0 %387
        %v389 = vrcp.pop %v388
        %v390 = vmul.f32 1.0, %v389
        %v391 = vmul.f32 %v385, %v390
        %v392 = vld [vmem:[%s280] sm:$0xf]
        %v393 = vld [vmem:[%s280 + $0x4] sm:$0xf]
        %v394 = vpack.c.bf16 %v391, %v391
        %v397 = vunpack.c.l.b16 %v392
        %v398 = vunpack.c.l.b16 %v393
        %v399 = vpack.c.b16 %v398, %v397
        %v402 = vsel %vm379, %v394, 0
        %404 = vmatprep.subr.bf16.mxu0 0
        %405 = vmatpush1.bf16.msra.mxu0 %v399
        %406 = vmatprep.subr.bf16.mxu0 0
        %407 = vmatpush1.bf16.msra.mxu0 0
        %408 = vmatprep.subr.bf16.mxu0 0
        %409 = vmatpush1.bf16.msra.mxu0 0
        %410 = vmatprep.subr.bf16.mxu0 0
        %411 = vmatpush1.bf16.msra.mxu0 0
        %412 = vmatprep.subr.bf16.mxu0 0
        %413 = vmatpush1.bf16.msra.mxu0 0
        %414 = vmatprep.subr.bf16.mxu0 0
        %415 = vmatpush1.bf16.msra.mxu0 0
        %416 = vmatprep.subr.bf16.mxu0 0
        %417 = vmatpush1.bf16.msra.mxu0 0
        %418 = vmatprep.subr.bf16.mxu0 0
        %419 = vmatpush1.bf16.msra.mxu0 0
        %420 = vmatprep.subr.bf16.mxu0 0
        %421 = vmatpush1.bf16.msra.mxu0 0
        %422 = vmatprep.subr.bf16.mxu0 0
        %423 = vmatpush1.bf16.msra.mxu0 0
        %424 = vmatprep.subr.bf16.mxu0 0
        %425 = vmatpush1.bf16.msra.mxu0 0
        %426 = vmatprep.subr.bf16.mxu0 0
        %427 = vmatpush1.bf16.msra.mxu0 0
        %428 = vmatprep.subr.bf16.mxu0 0
        %429 = vmatpush1.bf16.msra.mxu0 0
        %430 = vmatprep.subr.bf16.mxu0 0
        %431 = vmatpush1.bf16.msra.mxu0 0
        %432 = vmatprep.subr.bf16.mxu0 0
        %433 = vmatpush1.bf16.msra.mxu0 0
        %434 = vmatprep.subr.bf16.mxu0 0
        %435 = vmatpush1.bf16.msra.mxu0 0
        %436 = vmatprep.mubr.bf16.mxu0 0
        %437 = vmatmul.mubr.bf16.gmra.mrb[0].mxu0 %v402
        %v438 = vpop.f32.mrb[0].mxu0
        %v439 = vadd.f32 0.0, %v438
        %v440 = vpop.f32.mrb[0].mxu0
        %v441 = vpop.f32.mrb[0].mxu0
        %v442 = vpop.f32.mrb[0].mxu0
        %443 = vdwg.mxu0
        %444 = vst.msk [vmem:[%s319] sm:$0xff] %vm379, %v391
        %445 = vst.msk [vmem:[%s312] sm:$0xff] %vm332, %v439
        %s446 = sand.u32 %s130, 1
        %s447 = scalar_lea.sflag [#allocation4], %s446
        %s448 = sand.u32 %s130, 1
        %s449 = smul.addr %s448, 8
        %s450 = scalar_lea.vmem [#allocation8], %s449
        %s451 = sand.u32 %s158, 1
        %s452 = scalar_lea.sflag [#allocation10], %s451
        %s453 = sand.u32 %s158, 1
        %s454 = smul.addr %s453, 8
        %s455 = scalar_lea.vmem [#allocation9], %s454
        // Predicated region
        $region45: #{tpu_custom_call.1} parent=31 // pred_check
          %p456 = pneg %p140
        $region46: #{tpu_custom_call.1} parent=31 // pred_check_branch
          %458 = sbr.rel (%p456) target = $region48
        $region47: #{tpu_custom_call.1} parent=31 // pred_region
          %s460 = ssub.s32 128, 128
          %461 = vsyncadd %s447, %s460
          %s462 = sadd.s32 %s33, %s32
          %s463 = smul.addr %s462, 128
          %s464 = scalar_lea.hbm %s3, %s463
          %s466 = sshll.u32 %s450, 4
          %s467 = int_to_ptr.vmem [resolvable:$true] %s466
          %469 = dma.vmem_to_hbm [thread:$0]  %s467, 128, %s464, %s447
        $region48: #{tpu_custom_call.1} parent=31 // pred_fallthru
          _
        // Predicated region
        $region49: #{tpu_custom_call.1} parent=31 // pred_check
          %p470 = pneg %p168
        $region50: #{tpu_custom_call.1} parent=31 // pred_check_branch
          %472 = sbr.rel (%p470) target = $region52
        $region51: #{tpu_custom_call.1} parent=31 // pred_region
          %s474 = ssub.s32 128, 128
          %475 = vsyncadd %s452, %s474
          %s476 = sadd.s32 %s33, %s32
          %s477 = smul.addr %s476, 128
          %s478 = scalar_lea.hbm %s4, %s477
          %s480 = sshll.u32 %s455, 4
          %s481 = int_to_ptr.vmem [resolvable:$true] %s480
          %483 = dma.vmem_to_hbm [thread:$0]  %s481, 128, %s478, %s452
        $region52: #{tpu_custom_call.1} parent=31 // pred_fallthru
          _
      $region32: #{tpu_custom_call.1} parent=5 // pred_fallthru
        _
      %p484 = scmp.le.s32.totalorder 2, %s23
      // Predicated region
      $region53: #{tpu_custom_call.1} parent=5 // pred_check
        %p485 = pneg %p484
      $region54: #{tpu_custom_call.1} parent=5 // pred_check_branch
        %487 = sbr.rel (%p485) target = $region56
      $region55: #{tpu_custom_call.1} parent=5 // pred_region
        %s488 = ssub.s32 %s23, 2
        // Predicated region
        $region57: #{tpu_custom_call.1} parent=55 // pred_check
          %p489 = pneg %p146
        $region58: #{tpu_custom_call.1} parent=55 // pred_check_branch
          %491 = sbr.rel (%p489) target = $region60
        $region59: #{tpu_custom_call.1} parent=55 // pred_region
          %s492 = sand.u32 %s131, 1
          %s493 = scalar_lea.sflag [#allocation4], %s492
          %s494 = sand.u32 %s131, 1
          %s495 = smul.addr %s494, 8
          %s496 = scalar_lea.vmem [#allocation8], %s495
          %497 = dma.done %s493, 128
        $region60: #{tpu_custom_call.1} parent=55 // pred_fallthru
          _
        // Predicated region
        $region61: #{tpu_custom_call.1} parent=55 // pred_check
          %p498 = pneg %p174
        $region62: #{tpu_custom_call.1} parent=55 // pred_check_branch
          %500 = sbr.rel (%p498) target = $region64
        $region63: #{tpu_custom_call.1} parent=55 // pred_region
          %s501 = sand.u32 %s159, 1
          %s502 = scalar_lea.sflag [#allocation10], %s501
          %s503 = sand.u32 %s159, 1
          %s504 = smul.addr %s503, 8
          %s505 = scalar_lea.vmem [#allocation9], %s504
          %506 = dma.done %s502, 128
        $region64: #{tpu_custom_call.1} parent=55 // pred_fallthru
          _
      $region56: #{tpu_custom_call.1} parent=5 // pred_fallthru
        _
    $region6: #{tpu_custom_call.1} parent=1 // loop_footer
      %s27 = sadd.s32 1, %s23
    $region7: #{tpu_custom_call.1} parent=1 // loop_footer_branch
      %22 = sbr.rel target = $region3
    $region8: #{tpu_custom_call.1} parent=1 // loop_exit
      _
    %507 = vsyncpa [#allocation3], 1
    %s508 = scalar_lea.sflag [#allocation3], 1
    %509 = vsyncpa %s508, 1
    %510 = vsyncpa [#allocation6], 1
    %s511 = scalar_lea.sflag [#allocation6], 1
    %512 = vsyncpa %s511, 1
    %513 = vsyncpa [#allocation4], 1
    %s514 = scalar_lea.sflag [#allocation4], 1
    %515 = vsyncpa %s514, 1
    %516 = vsyncpa [#allocation10], 1
    %s517 = scalar_lea.sflag [#allocation10], 1
    %518 = vsyncpa %s517, 1

</llo_original>
